<compile_context>
chip_gen: v5e
topology: v5e:2x2
jax: 0.10.0
libtpu: 0.0.40
codegen_flags: <defaults>
</compile_context>

<pallas_src>
import functools

import jax
import jax.numpy as jnp
from jax import lax
from jax.experimental import pallas as pl
from jax.experimental.pallas import tpu as pltpu

HIDDEN = 256
_LANE = 128
_SUBLANE = 8


def _round_up(x, m):
    return (x + m - 1) // m * m


def _dueling_dqn_kernel(x_ref, w1_ref, b1_ref, w_out_ref, b_out_ref, wacs_ref,
                        out_ref, *, batch, n_actions):
    """Single-block fused Dueling-DQN forward.

    x_ref     : [B_pad, N_STATES]  f32
    w1_ref    : [N_STATES, 256]    bf16
    b1_ref    : [1, 256]           f32
    w_out_ref : [256, A_pad]       bf16   (wa + wv, zero-padded to 128 lanes)
    b_out_ref : [1, A_pad]         f32    (ba + bv - mean(ba), zero-padded)
    wacs_ref  : [1, 256]           f32    (sum over actions of wa columns)
    out_ref   : [B_pad, A_pad]     f32
    """
    # ---- fc1 + ReLU: bf16 on the MXU, f32 accumulate, f32 elementwise ------
    x16 = x_ref[...].astype(jnp.bfloat16)
    h = jnp.dot(x16, w1_ref[...], preferred_element_type=jnp.float32)
    h = jnp.maximum(h + b1_ref[...], 0.0)                       # [B_pad, 256]

    # ---- h-dependent part of the global advantage mean ---------------------
    #   mean(adv) = (sum_b h_b) . (sum_a wa[:, a]) / (B * A) + mean(ba)
    # (mean(ba) is already folded into b_out by the wrapper.)
    batch_pad = x_ref.shape[0]
    if batch_pad != batch:
        row_ids = lax.broadcasted_iota(jnp.int32, (batch_pad, 1), 0)
        h_valid = jnp.where(row_ids < batch, h, 0.0)             # mask pad rows
    else:
        h_valid = h
    h_sum = jnp.sum(h_valid, axis=0, keepdims=True)              # [1, 256] (XLU)
    adv_mean_h = jnp.sum(h_sum * wacs_ref[...]) * (1.0 / (batch * n_actions))

    # ---- fused value + advantage head: one MXU pass -------------------------
    heads = jnp.dot(h.astype(jnp.bfloat16), w_out_ref[...],
                    preferred_element_type=jnp.float32)          # [B_pad, A_pad]
    out_ref[...] = heads + b_out_ref[...] - adv_mean_h


def dueling_dqn_forward(x, params):
    """Forward pass. x: [B, N_STATES] f32; params as produced by init_params."""
    w1, b1, wa, ba, wv, bv = params
    batch, _ = x.shape
    n_actions = wa.shape[1]

    batch_pad = max(_round_up(batch, _SUBLANE), _SUBLANE)
    a_pad = max(_round_up(n_actions, _LANE), _LANE)

    # Fold the two heads into one lane-dense matmul (see module docstring).
    w_out = jnp.pad(wa + wv, ((0, 0), (0, a_pad - n_actions)))
    b_out = jnp.pad(ba + bv - jnp.mean(ba), ((0, 0), (0, a_pad - n_actions)))
    wacs = jnp.sum(wa, axis=1)[None, :]                          # [1, 256]

    if batch_pad != batch:
        x = jnp.pad(x, ((0, batch_pad - batch), (0, 0)))

    kernel = functools.partial(_dueling_dqn_kernel, batch=batch,
                               n_actions=n_actions)
    vmem = pltpu.MemorySpace.VMEM
    out = pl.pallas_call(
        kernel,
        out_shape=jax.ShapeDtypeStruct((batch_pad, a_pad), jnp.float32),
        in_specs=[pl.BlockSpec(memory_space=vmem)] * 6,
        out_specs=pl.BlockSpec(memory_space=vmem),
    )(x,
      w1.astype(jnp.bfloat16), b1,
      w_out.astype(jnp.bfloat16), b_out, wacs)
    return out[:batch, :n_actions]


def init_params(key, n_states, n_actions):
    """Synthetic init mirroring the PyTorch module.

    fc1.weight / advantages.weight ~ Normal(0, 0.1); biases and v_out.weight use
    torch's default uniform(-1/sqrt(fan_in), 1/sqrt(fan_in)).
    Weights stored as [in, out] (transposed vs. torch's [out, in]).
    """
    k1, k2, k3, k4, k5, k6 = jax.random.split(key, 6)
    w1 = 0.1 * jax.random.normal(k1, (n_states, HIDDEN), jnp.float32)
    b1 = jax.random.uniform(k2, (1, HIDDEN), jnp.float32,
                            -1.0 / jnp.sqrt(n_states), 1.0 / jnp.sqrt(n_states))
    wa = 0.1 * jax.random.normal(k3, (HIDDEN, n_actions), jnp.float32)
    ba = jax.random.uniform(k4, (1, n_actions), jnp.float32,
                            -1.0 / jnp.sqrt(HIDDEN), 1.0 / jnp.sqrt(HIDDEN))
    wv = jax.random.uniform(k5, (HIDDEN, 1), jnp.float32,
                            -1.0 / jnp.sqrt(HIDDEN), 1.0 / jnp.sqrt(HIDDEN))
    bv = jax.random.uniform(k6, (1, 1), jnp.float32,
                            -1.0 / jnp.sqrt(HIDDEN), 1.0 / jnp.sqrt(HIDDEN))
    return (w1, b1, wa, ba, wv, bv)


def reference_forward(x, params):
    """Pure-f32 JAX reference matching the PyTorch forward semantics."""
    w1, b1, wa, ba, wv, bv = params
    h = jnp.maximum(x @ w1 + b1, 0.0)
    adv = h @ wa + ba
    adv = adv - jnp.mean(adv)
    v = h @ wv + bv
    return v + adv


def reference_forward_bf16(x, params):
    """Same semantics, with bf16 MXU-dot inputs (matches kernel precision)."""
    w1, b1, wa, ba, wv, bv = params
    bf = jnp.bfloat16
    h = jnp.dot(x.astype(bf), w1.astype(bf),
                preferred_element_type=jnp.float32) + b1
    h = jnp.maximum(h, 0.0)
    adv = jnp.dot(h.astype(bf), wa.astype(bf),
                  preferred_element_type=jnp.float32) + ba
    v = jnp.dot(h.astype(bf), wv.astype(bf),
                preferred_element_type=jnp.float32) + bv
    return v + (adv - jnp.mean(adv))


if __name__ == "__main__":
    N_STATES = 16
    N_ACTIONS = 4

    key = jax.random.PRNGKey(0)
    kx, kp = jax.random.split(key)
    params = init_params(kp, N_STATES, N_ACTIONS)

    fwd = jax.jit(dueling_dqn_forward)

    # B=256: sublane-aligned batch that actually feeds the MXU (review target).
    # B=5:   exercises the batch-padding / masked global-mean path.
    for batch in (256, 5):
        xb = jax.random.normal(jax.random.fold_in(kx, batch),
                               (batch, N_STATES), jnp.float32)
        out = jax.block_until_ready(fwd(xb, params))
        assert out.shape == (batch, N_ACTIONS)

        ref16 = reference_forward_bf16(xb, params)   # same dot precision
        ref32 = reference_forward(xb, params)        # exact f32 semantics
        assert jnp.allclose(out, ref16, atol=3e-2, rtol=3e-2), (
            batch, float(jnp.max(jnp.abs(out - ref16))))
        assert jnp.allclose(out, ref32, atol=1e-1, rtol=1e-1), (
            batch, float(jnp.max(jnp.abs(out - ref32))))

    print("KERNEL_OK")
</pallas_src>

<mosaic_0001>
module attributes {stable_mosaic.version = 11 : i64} {
  func.func @_dueling_dqn_kernel(%arg0: memref<256x16xf32, #tpu.memory_space<vmem>>, %arg1: memref<16x256xbf16, #tpu.memory_space<vmem>>, %arg2: memref<1x256xf32, #tpu.memory_space<vmem>>, %arg3: memref<256x128xbf16, #tpu.memory_space<vmem>>, %arg4: memref<1x128xf32, #tpu.memory_space<vmem>>, %arg5: memref<1x256xf32, #tpu.memory_space<vmem>>, %arg6: memref<256x128xf32, #tpu.memory_space<vmem>>) attributes {dimension_semantics = [], scalar_prefetch = 0 : i64, scratch_operands = 0 : i64, tpu.core_type = #tpu.core_type<tc>} {
    %c0 = arith.constant 0 : index
    %c0_0 = arith.constant 0 : index
    %0 = vector.load %arg0[%c0, %c0_0] : memref<256x16xf32, #tpu.memory_space<vmem>>, vector<256x16xf32>
    %1 = arith.truncf %0 : vector<256x16xf32> to vector<256x16xbf16>
    %c0_1 = arith.constant 0 : index
    %c0_2 = arith.constant 0 : index
    %2 = vector.load %arg1[%c0_1, %c0_2] : memref<16x256xbf16, #tpu.memory_space<vmem>>, vector<16x256xbf16>
    %cst = arith.constant dense<0.000000e+00> : vector<256x256xf32>
    %3 = tpu.matmul %1, %2, %cst {dimension_numbers = #tpu.dot_dimension_numbers<[1], [0], [0], [1], [0, 0, 1, 1], [], []>} : vector<256x16xbf16>, vector<16x256xbf16>, vector<256x256xf32> -> vector<256x256xf32>
    %c0_3 = arith.constant 0 : index
    %c0_4 = arith.constant 0 : index
    %4 = vector.load %arg2[%c0_3, %c0_4] : memref<1x256xf32, #tpu.memory_space<vmem>>, vector<1x256xf32>
    %5 = vector.broadcast %4 : vector<1x256xf32> to vector<256x256xf32>
    %6 = arith.addf %3, %5 : vector<256x256xf32>
    %cst_5 = arith.constant 0.000000e+00 : f32
    %7 = vector.broadcast %cst_5 : f32 to vector<256x256xf32>
    %8 = arith.maximumf %6, %7 : vector<256x256xf32>
    %cst_6 = arith.constant dense<0.000000e+00> : vector<256xf32>
    %9 = vector.multi_reduction <add>, %8, %cst_6 [0] : vector<256x256xf32> to vector<256xf32>
    %10 = vector.shape_cast %9 : vector<256xf32> to vector<1x256xf32>
    %c0_7 = arith.constant 0 : index
    %c0_8 = arith.constant 0 : index
    %11 = vector.load %arg5[%c0_7, %c0_8] : memref<1x256xf32, #tpu.memory_space<vmem>>, vector<1x256xf32>
    %12 = arith.mulf %10, %11 : vector<1x256xf32>
    %13 = vector.shape_cast %12 : vector<1x256xf32> to vector<1x1x256xf32>
    %cst_9 = arith.constant dense<0.000000e+00> : vector<1xf32>
    %14 = vector.multi_reduction <add>, %13, %cst_9 [1, 2] : vector<1x1x256xf32> to vector<1xf32>
    %15 = vector.shape_cast %14 : vector<1xf32> to vector<1x1x1xf32>
    %16 = vector.extract %15[0, 0, 0] : f32 from vector<1x1x1xf32>
    %cst_10 = arith.constant 9.765625E-4 : f32
    %17 = arith.mulf %16, %cst_10 : f32
    %18 = arith.truncf %8 : vector<256x256xf32> to vector<256x256xbf16>
    %c0_11 = arith.constant 0 : index
    %c0_12 = arith.constant 0 : index
    %19 = vector.load %arg3[%c0_11, %c0_12] : memref<256x128xbf16, #tpu.memory_space<vmem>>, vector<256x128xbf16>
    %cst_13 = arith.constant dense<0.000000e+00> : vector<256x128xf32>
    %20 = tpu.matmul %18, %19, %cst_13 {dimension_numbers = #tpu.dot_dimension_numbers<[1], [0], [0], [1], [0, 0, 1, 1], [], []>} : vector<256x256xbf16>, vector<256x128xbf16>, vector<256x128xf32> -> vector<256x128xf32>
    %c0_14 = arith.constant 0 : index
    %c0_15 = arith.constant 0 : index
    %21 = vector.load %arg4[%c0_14, %c0_15] : memref<1x128xf32, #tpu.memory_space<vmem>>, vector<1x128xf32>
    %22 = vector.broadcast %21 : vector<1x128xf32> to vector<256x128xf32>
    %23 = arith.addf %20, %22 : vector<256x128xf32>
    %24 = vector.broadcast %17 : f32 to vector<256x128xf32>
    %25 = arith.subf %23, %24 : vector<256x128xf32>
    %c0_16 = arith.constant 0 : index
    %c0_17 = arith.constant 0 : index
    %26 = vector.load %arg6[%c0_16, %c0_17] : memref<256x128xf32, #tpu.memory_space<vmem>>, vector<256x128xf32>
    tpu.vector_store %arg6[%c0_16, %c0_17], %25 {strides = array<i32>} : memref<256x128xf32, #tpu.memory_space<vmem>>, vector<256x128xf32>,
    return
  }
}

</mosaic_0001>

<llo_original>
// kernel: dueling_dqn_forward.1
$region0: #{dueling_dqn_forward.1}
  #allocation0 [shape = 'u32[]', space=smem, size = 0x4, offset = 0x4, fixed_abs, tag = 'smem constant byte address 0x4 - core index']
  #allocation1 [shape = 'u32[72,128]{1,0:T(1,128)}', space=vmem, size = 0x9000, scoped, tag = 'internal scratch']
  %s0 = inlined_call_operand.vmem [shape: f32[256,16], index: 0, kind: input, shape index: {}]
  %s1 = inlined_call_operand.vmem [shape: bf16[16,256], index: 1, kind: input, shape index: {}]
  %s2 = inlined_call_operand.vmem [shape: f32[1,256], index: 2, kind: input, shape index: {}]
  %s3 = inlined_call_operand.vmem [shape: bf16[256,128], index: 3, kind: input, shape index: {}]
  %s4 = inlined_call_operand.vmem [shape: f32[1,128], index: 4, kind: input, shape index: {}]
  %s5 = inlined_call_operand.vmem [shape: f32[1,256], index: 5, kind: input, shape index: {}]
  %s6 = inlined_call_operand.vmem [shape: f32[256,128], index: 6, kind: output, shape index: {}]
  %s7 = sld [smem:[#allocation0]]
  $region34: #{dueling_dqn_forward.1} parent=0
    _
  %s9 = ssub.s32 1, %s7
  %s10 = scalar_select 0, %s9, %s7
  // Predicated region
  $region2: #{dueling_dqn_forward.1} parent=0 // pred_check
    _
  $region3: #{dueling_dqn_forward.1} parent=0 // pred_check_branch
    %12 = sbr.rel (0) target = $region5
  $region4: #{dueling_dqn_forward.1} parent=0 // pred_region
    _
  $region5: #{dueling_dqn_forward.1} parent=0 // pred_fallthru
    _
  // Predicated region
  $region6: #{dueling_dqn_forward.1} parent=0 // pred_check
    _
  $region7: #{dueling_dqn_forward.1} parent=0 // pred_check_branch
    %14 = sbr.rel (0) target = $region9
  $region8: #{dueling_dqn_forward.1} parent=0 // pred_region
    _
  $region9: #{dueling_dqn_forward.1} parent=0 // pred_fallthru
    _
  // Predicated region
  $region10: #{dueling_dqn_forward.1} parent=0 // pred_check
    _
  $region11: #{dueling_dqn_forward.1} parent=0 // pred_check_branch
    %16 = sbr.rel (0) target = $region13
  $region12: #{dueling_dqn_forward.1} parent=0 // pred_region
    _
  $region13: #{dueling_dqn_forward.1} parent=0 // pred_fallthru
    _
  // Predicated region
  $region14: #{dueling_dqn_forward.1} parent=0 // pred_check
    _
  $region15: #{dueling_dqn_forward.1} parent=0 // pred_check_branch
    %18 = sbr.rel (0) target = $region17
  $region16: #{dueling_dqn_forward.1} parent=0 // pred_region
    _
  $region17: #{dueling_dqn_forward.1} parent=0 // pred_fallthru
    _
  // Predicated region
  $region18: #{dueling_dqn_forward.1} parent=0 // pred_check
    _
  $region19: #{dueling_dqn_forward.1} parent=0 // pred_check_branch
    %20 = sbr.rel (0) target = $region21
  $region20: #{dueling_dqn_forward.1} parent=0 // pred_region
    _
  $region21: #{dueling_dqn_forward.1} parent=0 // pred_fallthru
    _
  // Predicated region
  $region22: #{dueling_dqn_forward.1} parent=0 // pred_check
    _
  $region23: #{dueling_dqn_forward.1} parent=0 // pred_check_branch
    %22 = sbr.rel (0) target = $region25
  $region24: #{dueling_dqn_forward.1} parent=0 // pred_region
    _
  $region25: #{dueling_dqn_forward.1} parent=0 // pred_fallthru
    _
  %v24 = vld [vmem:[%s0] sm:$0xff]
  %v25 = vld [vmem:[%s0 + $0x8] sm:$0xff]
  %v26 = vld [vmem:[%s0 + $0x10] sm:$0xff]
  %v27 = vld [vmem:[%s0 + $0x18] sm:$0xff]
  %v28 = vld [vmem:[%s0 + $0x20] sm:$0xff]
  %v29 = vld [vmem:[%s0 + $0x28] sm:$0xff]
  %v30 = vld [vmem:[%s0 + $0x30] sm:$0xff]
  %v31 = vld [vmem:[%s0 + $0x38] sm:$0xff]
  %v32 = vld [vmem:[%s0 + $0x40] sm:$0xff]
  %v33 = vld [vmem:[%s0 + $0x48] sm:$0xff]
  %v34 = vld [vmem:[%s0 + $0x50] sm:$0xff]
  %v35 = vld [vmem:[%s0 + $0x58] sm:$0xff]
  %v36 = vld [vmem:[%s0 + $0x60] sm:$0xff]
  %v37 = vld [vmem:[%s0 + $0x68] sm:$0xff]
  %v38 = vld [vmem:[%s0 + $0x70] sm:$0xff]
  %v39 = vld [vmem:[%s0 + $0x78] sm:$0xff]
  %v40 = vld [vmem:[%s0 + $0x80] sm:$0xff]
  %v41 = vld [vmem:[%s0 + $0x88] sm:$0xff]
  %v42 = vld [vmem:[%s0 + $0x90] sm:$0xff]
  %v43 = vld [vmem:[%s0 + $0x98] sm:$0xff]
  %v44 = vld [vmem:[%s0 + $0xa0] sm:$0xff]
  %v45 = vld [vmem:[%s0 + $0xa8] sm:$0xff]
  %v46 = vld [vmem:[%s0 + $0xb0] sm:$0xff]
  %v47 = vld [vmem:[%s0 + $0xb8] sm:$0xff]
  %v48 = vld [vmem:[%s0 + $0xc0] sm:$0xff]
  %v49 = vld [vmem:[%s0 + $0xc8] sm:$0xff]
  %v50 = vld [vmem:[%s0 + $0xd0] sm:$0xff]
  %v51 = vld [vmem:[%s0 + $0xd8] sm:$0xff]
  %v52 = vld [vmem:[%s0 + $0xe0] sm:$0xff]
  %v53 = vld [vmem:[%s0 + $0xe8] sm:$0xff]
  %v54 = vld [vmem:[%s0 + $0xf0] sm:$0xff]
  %v55 = vld [vmem:[%s0 + $0xf8] sm:$0xff]
  %v56 = vpack.c.bf16 %v25, %v24
  %v57 = vpack.c.bf16 %v27, %v26
  %v58 = vpack.c.bf16 %v29, %v28
  %v59 = vpack.c.bf16 %v31, %v30
  %v60 = vpack.c.bf16 %v33, %v32
  %v61 = vpack.c.bf16 %v35, %v34
  %v62 = vpack.c.bf16 %v37, %v36
  %v63 = vpack.c.bf16 %v39, %v38
  %v64 = vpack.c.bf16 %v41, %v40
  %v65 = vpack.c.bf16 %v43, %v42
  %v66 = vpack.c.bf16 %v45, %v44
  %v67 = vpack.c.bf16 %v47, %v46
  %v68 = vpack.c.bf16 %v49, %v48
  %v69 = vpack.c.bf16 %v51, %v50
  %v70 = vpack.c.bf16 %v53, %v52
  %v71 = vpack.c.bf16 %v55, %v54
  %v72 = vld [vmem:[%s1] sm:$0xff]
  %v73 = vld [vmem:[%s1 + $0x8] sm:$0xff]
  %v74 = vld [vmem:[%s2] sm:$0x3]
  %v76 = vperm.slane %v74, 0
  %v77 = vperm.slane %v74, 1
  %v82 = vunpack.c.l.b16 %v72
  %v83 = vunpack.c.h.b16 %v72
  %v84 = vunpack.c.l.b16 %v73
  %v85 = vunpack.c.h.b16 %v73
  %v86 = vpack.c.b16 %v84, %v82
  %v87 = vpack.c.b16 %v85, %v83
  %vm90 = vcmask 130048
  %v92 = vsel %vm90, %v56, 0
  %v95 = vsel %vm90, %v57, 0
  %v98 = vsel %vm90, %v58, 0
  %v101 = vsel %vm90, %v59, 0
  %v104 = vsel %vm90, %v60, 0
  %v107 = vsel %vm90, %v61, 0
  %v110 = vsel %vm90, %v62, 0
  %v113 = vsel %vm90, %v63, 0
  %v116 = vsel %vm90, %v64, 0
  %v119 = vsel %vm90, %v65, 0
  %v122 = vsel %vm90, %v66, 0
  %v125 = vsel %vm90, %v67, 0
  %v128 = vsel %vm90, %v68, 0
  %v131 = vsel %vm90, %v69, 0
  %v134 = vsel %vm90, %v70, 0
  %v137 = vsel %vm90, %v71, 0
  %139 = vmatpush.bf16.msra.mxu0 0
  %140 = vmatpush.bf16.msra.mxu0 0
  %141 = vmatpush.bf16.msra.mxu0 0
  %142 = vmatpush.bf16.msra.mxu0 0
  %143 = vmatpush.bf16.msra.mxu0 0
  %144 = vmatpush.bf16.msra.mxu0 0
  %145 = vmatpush.bf16.msra.mxu0 0
  %146 = vmatpush.bf16.msra.mxu0 %v86
  %147 = vmatmul.bf16.gmra.mxu0 %v92
  %v148 = vpop.f32.mrf.mxu0
  %v149 = vadd.f32 %v76, %v148
  %v150 = vpop.f32.mrf.mxu0
  %v151 = vadd.f32 %v76, %v150
  %152 = vmatmul.bf16.gmra.mxu0 %v95
  %v153 = vpop.f32.mrf.mxu0
  %v154 = vadd.f32 %v76, %v153
  %v155 = vpop.f32.mrf.mxu0
  %v156 = vadd.f32 %v76, %v155
  %157 = vmatmul.bf16.gmra.mxu0 %v98
  %v158 = vpop.f32.mrf.mxu0
  %v159 = vadd.f32 %v76, %v158
  %v160 = vpop.f32.mrf.mxu0
  %v161 = vadd.f32 %v76, %v160
  %162 = vmatmul.bf16.gmra.mxu0 %v101
  %v163 = vpop.f32.mrf.mxu0
  %v164 = vadd.f32 %v76, %v163
  %v165 = vpop.f32.mrf.mxu0
  %v166 = vadd.f32 %v76, %v165
  %167 = vmatmul.bf16.gmra.mxu0 %v104
  %v168 = vpop.f32.mrf.mxu0
  %v169 = vadd.f32 %v76, %v168
  %v170 = vpop.f32.mrf.mxu0
  %v171 = vadd.f32 %v76, %v170
  %172 = vmatmul.bf16.gmra.mxu0 %v107
  %v173 = vpop.f32.mrf.mxu0
  %v174 = vadd.f32 %v76, %v173
  %v175 = vpop.f32.mrf.mxu0
  %v176 = vadd.f32 %v76, %v175
  %177 = vmatmul.bf16.gmra.mxu0 %v110
  %v178 = vpop.f32.mrf.mxu0
  %v179 = vadd.f32 %v76, %v178
  %v180 = vpop.f32.mrf.mxu0
  %v181 = vadd.f32 %v76, %v180
  %182 = vmatmul.bf16.gmra.mxu0 %v113
  %v183 = vpop.f32.mrf.mxu0
  %v184 = vadd.f32 %v76, %v183
  %v185 = vpop.f32.mrf.mxu0
  %v186 = vadd.f32 %v76, %v185
  %187 = vmatmul.bf16.gmra.mxu0 %v116
  %v188 = vpop.f32.mrf.mxu0
  %v189 = vadd.f32 %v76, %v188
  %v190 = vpop.f32.mrf.mxu0
  %v191 = vadd.f32 %v76, %v190
  %192 = vmatmul.bf16.gmra.mxu0 %v119
  %v193 = vpop.f32.mrf.mxu0
  %v194 = vadd.f32 %v76, %v193
  %v195 = vpop.f32.mrf.mxu0
  %v196 = vadd.f32 %v76, %v195
  %197 = vmatmul.bf16.gmra.mxu0 %v122
  %v198 = vpop.f32.mrf.mxu0
  %v199 = vadd.f32 %v76, %v198
  %v200 = vpop.f32.mrf.mxu0
  %v201 = vadd.f32 %v76, %v200
  %202 = vmatmul.bf16.gmra.mxu0 %v125
  %v203 = vpop.f32.mrf.mxu0
  %v204 = vadd.f32 %v76, %v203
  %v205 = vpop.f32.mrf.mxu0
  %v206 = vadd.f32 %v76, %v205
  %207 = vmatmul.bf16.gmra.mxu0 %v128
  %v208 = vpop.f32.mrf.mxu0
  %v209 = vadd.f32 %v76, %v208
  %v210 = vpop.f32.mrf.mxu0
  %v211 = vadd.f32 %v76, %v210
  %212 = vmatmul.bf16.gmra.mxu0 %v131
  %v213 = vpop.f32.mrf.mxu0
  %v214 = vadd.f32 %v76, %v213
  %v215 = vpop.f32.mrf.mxu0
  %v216 = vadd.f32 %v76, %v215
  %217 = vmatmul.bf16.gmra.mxu0 %v134
  %v218 = vpop.f32.mrf.mxu0
  %v219 = vadd.f32 %v76, %v218
  %v220 = vpop.f32.mrf.mxu0
  %v221 = vadd.f32 %v76, %v220
  %222 = vmatmul.bf16.gmra.mxu0 %v137
  %v223 = vpop.f32.mrf.mxu0
  %v224 = vadd.f32 %v76, %v223
  %v225 = vpop.f32.mrf.mxu0
  %v226 = vadd.f32 %v76, %v225
  %227 = vdwg.mxu0
  %228 = vmatpush.bf16.msra.mxu0 0
  %229 = vmatpush.bf16.msra.mxu0 0
  %230 = vmatpush.bf16.msra.mxu0 0
  %231 = vmatpush.bf16.msra.mxu0 0
  %232 = vmatpush.bf16.msra.mxu0 0
  %233 = vmatpush.bf16.msra.mxu0 0
  %234 = vmatpush.bf16.msra.mxu0 0
  %235 = vmatpush.bf16.msra.mxu0 %v87
  %236 = vmatmul.bf16.gmra.mxu0 %v92
  %v237 = vpop.f32.mrf.mxu0
  %v238 = vadd.f32 %v77, %v237
  %v239 = vpop.f32.mrf.mxu0
  %v240 = vadd.f32 %v77, %v239
  %241 = vmatmul.bf16.gmra.mxu0 %v95
  %v242 = vpop.f32.mrf.mxu0
  %v243 = vadd.f32 %v77, %v242
  %v244 = vpop.f32.mrf.mxu0
  %v245 = vadd.f32 %v77, %v244
  %246 = vmatmul.bf16.gmra.mxu0 %v98
  %v247 = vpop.f32.mrf.mxu0
  %v248 = vadd.f32 %v77, %v247
  %v249 = vpop.f32.mrf.mxu0
  %v250 = vadd.f32 %v77, %v249
  %251 = vmatmul.bf16.gmra.mxu0 %v101
  %v252 = vpop.f32.mrf.mxu0
  %v253 = vadd.f32 %v77, %v252
  %v254 = vpop.f32.mrf.mxu0
  %v255 = vadd.f32 %v77, %v254
  %256 = vmatmul.bf16.gmra.mxu0 %v104
  %v257 = vpop.f32.mrf.mxu0
  %v258 = vadd.f32 %v77, %v257
  %v259 = vpop.f32.mrf.mxu0
  %v260 = vadd.f32 %v77, %v259
  %261 = vmatmul.bf16.gmra.mxu0 %v107
  %v262 = vpop.f32.mrf.mxu0
  %v263 = vadd.f32 %v77, %v262
  %v264 = vpop.f32.mrf.mxu0
  %v265 = vadd.f32 %v77, %v264
  %266 = vmatmul.bf16.gmra.mxu0 %v110
  %v267 = vpop.f32.mrf.mxu0
  %v268 = vadd.f32 %v77, %v267
  %v269 = vpop.f32.mrf.mxu0
  %v270 = vadd.f32 %v77, %v269
  %271 = vmatmul.bf16.gmra.mxu0 %v113
  %v272 = vpop.f32.mrf.mxu0
  %v273 = vadd.f32 %v77, %v272
  %v274 = vpop.f32.mrf.mxu0
  %v275 = vadd.f32 %v77, %v274
  %276 = vmatmul.bf16.gmra.mxu0 %v116
  %v277 = vpop.f32.mrf.mxu0
  %v278 = vadd.f32 %v77, %v277
  %v279 = vpop.f32.mrf.mxu0
  %v280 = vadd.f32 %v77, %v279
  %281 = vmatmul.bf16.gmra.mxu0 %v119
  %v282 = vpop.f32.mrf.mxu0
  %v283 = vadd.f32 %v77, %v282
  %v284 = vpop.f32.mrf.mxu0
  %v285 = vadd.f32 %v77, %v284
  %286 = vmatmul.bf16.gmra.mxu0 %v122
  %v287 = vpop.f32.mrf.mxu0
  %v288 = vadd.f32 %v77, %v287
  %v289 = vpop.f32.mrf.mxu0
  %v290 = vadd.f32 %v77, %v289
  %291 = vmatmul.bf16.gmra.mxu0 %v125
  %v292 = vpop.f32.mrf.mxu0
  %v293 = vadd.f32 %v77, %v292
  %v294 = vpop.f32.mrf.mxu0
  %v295 = vadd.f32 %v77, %v294
  %296 = vmatmul.bf16.gmra.mxu0 %v128
  %v297 = vpop.f32.mrf.mxu0
  %v298 = vadd.f32 %v77, %v297
  %v299 = vpop.f32.mrf.mxu0
  %v300 = vadd.f32 %v77, %v299
  %301 = vmatmul.bf16.gmra.mxu0 %v131
  %v302 = vpop.f32.mrf.mxu0
  %v303 = vadd.f32 %v77, %v302
  %v304 = vpop.f32.mrf.mxu0
  %v305 = vadd.f32 %v77, %v304
  %306 = vmatmul.bf16.gmra.mxu0 %v134
  %v307 = vpop.f32.mrf.mxu0
  %v308 = vadd.f32 %v77, %v307
  %v309 = vpop.f32.mrf.mxu0
  %v310 = vadd.f32 %v77, %v309
  %311 = vmatmul.bf16.gmra.mxu0 %v137
  %v312 = vpop.f32.mrf.mxu0
  %v313 = vadd.f32 %v77, %v312
  %v314 = vpop.f32.mrf.mxu0
  %v315 = vadd.f32 %v77, %v314
  %316 = vdwg.mxu0
  %v317 = vmax.f32 %v149, 0.0
  %v318 = vmax.f32 %v238, 0.0
  %v319 = vmax.f32 %v151, 0.0
  %v320 = vmax.f32 %v240, 0.0
  %v321 = vmax.f32 %v154, 0.0
  %v322 = vmax.f32 %v243, 0.0
  %v323 = vmax.f32 %v156, 0.0
  %v324 = vmax.f32 %v245, 0.0
  %v325 = vmax.f32 %v159, 0.0
  %v326 = vmax.f32 %v248, 0.0
  %v327 = vmax.f32 %v161, 0.0
  %v328 = vmax.f32 %v250, 0.0
  %v329 = vmax.f32 %v164, 0.0
  %v330 = vmax.f32 %v253, 0.0
  %v331 = vmax.f32 %v166, 0.0
  %v332 = vmax.f32 %v255, 0.0
  %v333 = vmax.f32 %v169, 0.0
  %v334 = vmax.f32 %v258, 0.0
  %v335 = vmax.f32 %v171, 0.0
  %v336 = vmax.f32 %v260, 0.0
  %v337 = vmax.f32 %v174, 0.0
  %v338 = vmax.f32 %v263, 0.0
  %v339 = vmax.f32 %v176, 0.0
  %v340 = vmax.f32 %v265, 0.0
  %v341 = vmax.f32 %v179, 0.0
  %v342 = vmax.f32 %v268, 0.0
  %v343 = vmax.f32 %v181, 0.0
  %v344 = vmax.f32 %v270, 0.0
  %v345 = vmax.f32 %v184, 0.0
  %v346 = vmax.f32 %v273, 0.0
  %v347 = vmax.f32 %v186, 0.0
  %v348 = vmax.f32 %v275, 0.0
  %v349 = vmax.f32 %v189, 0.0
  %v350 = vmax.f32 %v278, 0.0
  %v351 = vmax.f32 %v191, 0.0
  %v352 = vmax.f32 %v280, 0.0
  %v353 = vmax.f32 %v194, 0.0
  %v354 = vmax.f32 %v283, 0.0
  %v355 = vmax.f32 %v196, 0.0
  %v356 = vmax.f32 %v285, 0.0
  %v357 = vmax.f32 %v199, 0.0
  %v358 = vmax.f32 %v288, 0.0
  %v359 = vmax.f32 %v201, 0.0
  %v360 = vmax.f32 %v290, 0.0
  %v361 = vmax.f32 %v204, 0.0
  %v362 = vmax.f32 %v293, 0.0
  %v363 = vmax.f32 %v206, 0.0
  %v364 = vmax.f32 %v295, 0.0
  %v365 = vmax.f32 %v209, 0.0
  %v366 = vmax.f32 %v298, 0.0
  %v367 = vmax.f32 %v211, 0.0
  %v368 = vmax.f32 %v300, 0.0
  %v369 = vmax.f32 %v214, 0.0
  %v370 = vmax.f32 %v303, 0.0
  %v371 = vmax.f32 %v216, 0.0
  %v372 = vmax.f32 %v305, 0.0
  %v373 = vmax.f32 %v219, 0.0
  %v374 = vmax.f32 %v308, 0.0
  %v375 = vmax.f32 %v221, 0.0
  %v376 = vmax.f32 %v310, 0.0
  %v377 = vmax.f32 %v224, 0.0
  %v378 = vmax.f32 %v313, 0.0
  %v379 = vmax.f32 %v226, 0.0
  %v380 = vmax.f32 %v315, 0.0
  %v381 = vadd.f32 %v317, %v319
  %v382 = vadd.f32 %v381, %v321
  %v383 = vadd.f32 %v382, %v323
  %v384 = vadd.f32 %v383, %v325
  %v385 = vadd.f32 %v384, %v327
  %v386 = vadd.f32 %v385, %v329
  %v387 = vadd.f32 %v386, %v331
  %v388 = vadd.f32 %v387, %v333
  %v389 = vadd.f32 %v388, %v335
  %v390 = vadd.f32 %v389, %v337
  %v391 = vadd.f32 %v390, %v339
  %v392 = vadd.f32 %v391, %v341
  %v393 = vadd.f32 %v392, %v343
  %v394 = vadd.f32 %v393, %v345
  %v395 = vadd.f32 %v394, %v347
  %v396 = vadd.f32 %v395, %v349
  %v397 = vadd.f32 %v396, %v351
  %v398 = vadd.f32 %v397, %v353
  %v399 = vadd.f32 %v398, %v355
  %v400 = vadd.f32 %v399, %v357
  %v401 = vadd.f32 %v400, %v359
  %v402 = vadd.f32 %v401, %v361
  %v403 = vadd.f32 %v402, %v363
  %v404 = vadd.f32 %v403, %v365
  %v405 = vadd.f32 %v404, %v367
  %v406 = vadd.f32 %v405, %v369
  %v407 = vadd.f32 %v406, %v371
  %v408 = vadd.f32 %v407, %v373
  %v409 = vadd.f32 %v408, %v375
  %v410 = vadd.f32 %v409, %v377
  %v411 = vadd.f32 %v410, %v379
  %v412 = vrot.slane %v411, 4
  %v413 = vadd.f32 %v411, %v412
  %v414 = vrot.slane %v413, 2
  %v415 = vadd.f32 %v413, %v414
  %v416 = vrot.slane %v415, 1
  %v417 = vadd.f32 %v415, %v416
  %v418 = vadd.f32 %v318, %v320
  %v419 = vadd.f32 %v418, %v322
  %v420 = vadd.f32 %v419, %v324
  %v421 = vadd.f32 %v420, %v326
  %v422 = vadd.f32 %v421, %v328
  %v423 = vadd.f32 %v422, %v330
  %v424 = vadd.f32 %v423, %v332
  %v425 = vadd.f32 %v424, %v334
  %v426 = vadd.f32 %v425, %v336
  %v427 = vadd.f32 %v426, %v338
  %v428 = vadd.f32 %v427, %v340
  %v429 = vadd.f32 %v428, %v342
  %v430 = vadd.f32 %v429, %v344
  %v431 = vadd.f32 %v430, %v346
  %v432 = vadd.f32 %v431, %v348
  %v433 = vadd.f32 %v432, %v350
  %v434 = vadd.f32 %v433, %v352
  %v435 = vadd.f32 %v434, %v354
  %v436 = vadd.f32 %v435, %v356
  %v437 = vadd.f32 %v436, %v358
  %v438 = vadd.f32 %v437, %v360
  %v439 = vadd.f32 %v438, %v362
  %v440 = vadd.f32 %v439, %v364
  %v441 = vadd.f32 %v440, %v366
  %v442 = vadd.f32 %v441, %v368
  %v443 = vadd.f32 %v442, %v370
  %v444 = vadd.f32 %v443, %v372
  %v445 = vadd.f32 %v444, %v374
  %v446 = vadd.f32 %v445, %v376
  %v447 = vadd.f32 %v446, %v378
  %v448 = vadd.f32 %v447, %v380
  %v449 = vrot.slane %v448, 4
  %v450 = vadd.f32 %v448, %v449
  %v451 = vrot.slane %v450, 2
  %v452 = vadd.f32 %v450, %v451
  %v453 = vrot.slane %v452, 1
  %v454 = vadd.f32 %v452, %v453
  %v455 = vld [vmem:[%s5] sm:$0x3]
  %v457 = vperm.slane %v455, 0
  %v458 = vperm.slane %v455, 1
  %v461 = vmul.f32 %v417, %v457
  %v462 = vmul.f32 %v454, %v458
  %vm463 = vcmask 1040384
  %v464 = vsel %vm463, %v461, 0.0
  %v465 = vsel %vm463, %v462, 0.0
  %v466 = vadd.f32 %v464, %v465
  %467 = vadd.xlane.f32.xlu0 %v466
  %v468 = vpop.xlane.xlu0 %467
  %v469 = vrot.slane %v468, 4
  %v470 = vadd.f32 %v468, %v469
  %v471 = vrot.slane %v470, 2
  %v472 = vadd.f32 %v470, %v471
  %v473 = vrot.slane %v472, 1
  %v474 = vadd.f32 %v472, %v473
  %s475 = vtos %v474
  %s476 = smul.f32 %s475, 0.0009765625
  %v477 = vpack.c.bf16 %v319, %v317
  %v478 = vpack.c.bf16 %v320, %v318
  %v479 = vpack.c.bf16 %v323, %v321
  %v480 = vpack.c.bf16 %v324, %v322
  %v481 = vpack.c.bf16 %v327, %v325
  %v482 = vpack.c.bf16 %v328, %v326
  %v483 = vpack.c.bf16 %v331, %v329
  %v484 = vpack.c.bf16 %v332, %v330
  %v485 = vpack.c.bf16 %v335, %v333
  %v486 = vpack.c.bf16 %v336, %v334
  %v487 = vpack.c.bf16 %v339, %v337
  %v488 = vpack.c.bf16 %v340, %v338
  %v489 = vpack.c.bf16 %v343, %v341
  %v490 = vpack.c.bf16 %v344, %v342
  %v491 = vpack.c.bf16 %v347, %v345
  %v492 = vpack.c.bf16 %v348, %v346
  %v493 = vpack.c.bf16 %v351, %v349
  %v494 = vpack.c.bf16 %v352, %v350
  %v495 = vpack.c.bf16 %v355, %v353
  %v496 = vpack.c.bf16 %v356, %v354
  %v497 = vpack.c.bf16 %v359, %v357
  %v498 = vpack.c.bf16 %v360, %v358
  %v499 = vpack.c.bf16 %v363, %v361
  %v500 = vpack.c.bf16 %v364, %v362
  %v501 = vpack.c.bf16 %v367, %v365
  %v502 = vpack.c.bf16 %v368, %v366
  %v503 = vpack.c.bf16 %v371, %v369
  %v504 = vpack.c.bf16 %v372, %v370
  %v505 = vpack.c.bf16 %v375, %v373
  %v506 = vpack.c.bf16 %v376, %v374
  %v507 = vpack.c.bf16 %v379, %v377
  %v508 = vpack.c.bf16 %v380, %v378
  %v509 = vld [vmem:[%s3] sm:$0xf]
  %v510 = vld [vmem:[%s3 + $0x4] sm:$0xf]
  %v511 = vld [vmem:[%s3 + $0x8] sm:$0xf]
  %v512 = vld [vmem:[%s3 + $0xc] sm:$0xf]
  %v513 = vld [vmem:[%s3 + $0x10] sm:$0xf]
  %v514 = vld [vmem:[%s3 + $0x14] sm:$0xf]
  %v515 = vld [vmem:[%s3 + $0x18] sm:$0xf]
  %v516 = vld [vmem:[%s3 + $0x1c] sm:$0xf]
  %v517 = vld [vmem:[%s3 + $0x20] sm:$0xf]
  %v518 = vld [vmem:[%s3 + $0x24] sm:$0xf]
  %v519 = vld [vmem:[%s3 + $0x28] sm:$0xf]
  %v520 = vld [vmem:[%s3 + $0x2c] sm:$0xf]
  %v521 = vld [vmem:[%s3 + $0x30] sm:$0xf]
  %v522 = vld [vmem:[%s3 + $0x34] sm:$0xf]
  %v523 = vld [vmem:[%s3 + $0x38] sm:$0xf]
  %v524 = vld [vmem:[%s3 + $0x3c] sm:$0xf]
  %v525 = vld [vmem:[%s3 + $0x40] sm:$0xf]
  %v526 = vld [vmem:[%s3 + $0x44] sm:$0xf]
  %v527 = vld [vmem:[%s3 + $0x48] sm:$0xf]
  %v528 = vld [vmem:[%s3 + $0x4c] sm:$0xf]
  %v529 = vld [vmem:[%s3 + $0x50] sm:$0xf]
  %v530 = vld [vmem:[%s3 + $0x54] sm:$0xf]
  %v531 = vld [vmem:[%s3 + $0x58] sm:$0xf]
  %v532 = vld [vmem:[%s3 + $0x5c] sm:$0xf]
  %v533 = vld [vmem:[%s3 + $0x60] sm:$0xf]
  %v534 = vld [vmem:[%s3 + $0x64] sm:$0xf]
  %v535 = vld [vmem:[%s3 + $0x68] sm:$0xf]
  %v536 = vld [vmem:[%s3 + $0x6c] sm:$0xf]
  %v537 = vld [vmem:[%s3 + $0x70] sm:$0xf]
  %v538 = vld [vmem:[%s3 + $0x74] sm:$0xf]
  %v539 = vld [vmem:[%s3 + $0x78] sm:$0xf]
  %v540 = vld [vmem:[%s3 + $0x7c] sm:$0xf]
  %v541 = vld [vmem:[%s4] sm:$0x1]
  %v543 = vperm.slane %v541, 0
  %v577 = vunpack.c.l.b16 %v509
  %v578 = vunpack.c.l.b16 %v510
  %v579 = vunpack.c.l.b16 %v511
  %v580 = vunpack.c.l.b16 %v512
  %v581 = vunpack.c.l.b16 %v513
  %v582 = vunpack.c.l.b16 %v514
  %v583 = vunpack.c.l.b16 %v515
  %v584 = vunpack.c.l.b16 %v516
  %v585 = vunpack.c.l.b16 %v517
  %v586 = vunpack.c.l.b16 %v518
  %v587 = vunpack.c.l.b16 %v519
  %v588 = vunpack.c.l.b16 %v520
  %v589 = vunpack.c.l.b16 %v521
  %v590 = vunpack.c.l.b16 %v522
  %v591 = vunpack.c.l.b16 %v523
  %v592 = vunpack.c.l.b16 %v524
  %v593 = vunpack.c.l.b16 %v525
  %v594 = vunpack.c.l.b16 %v526
  %v595 = vunpack.c.l.b16 %v527
  %v596 = vunpack.c.l.b16 %v528
  %v597 = vunpack.c.l.b16 %v529
  %v598 = vunpack.c.l.b16 %v530
  %v599 = vunpack.c.l.b16 %v531
  %v600 = vunpack.c.l.b16 %v532
  %v601 = vunpack.c.l.b16 %v533
  %v602 = vunpack.c.l.b16 %v534
  %v603 = vunpack.c.l.b16 %v535
  %v604 = vunpack.c.l.b16 %v536
  %v605 = vunpack.c.l.b16 %v537
  %v606 = vunpack.c.l.b16 %v538
  %v607 = vunpack.c.l.b16 %v539
  %v608 = vunpack.c.l.b16 %v540
  %v609 = vpack.c.b16 %v578, %v577
  %v610 = vpack.c.b16 %v580, %v579
  %v611 = vpack.c.b16 %v582, %v581
  %v612 = vpack.c.b16 %v584, %v583
  %v613 = vpack.c.b16 %v586, %v585
  %v614 = vpack.c.b16 %v588, %v587
  %v615 = vpack.c.b16 %v590, %v589
  %v616 = vpack.c.b16 %v592, %v591
  %v617 = vpack.c.b16 %v594, %v593
  %v618 = vpack.c.b16 %v596, %v595
  %v619 = vpack.c.b16 %v598, %v597
  %v620 = vpack.c.b16 %v600, %v599
  %v621 = vpack.c.b16 %v602, %v601
  %v622 = vpack.c.b16 %v604, %v603
  %v623 = vpack.c.b16 %v606, %v605
  %v624 = vpack.c.b16 %v608, %v607
  %641 = vmatpush.bf16.msra.mxu0 %v616
  %642 = vmatpush.bf16.msra.mxu0 %v615
  %643 = vmatpush.bf16.msra.mxu0 %v614
  %644 = vmatpush.bf16.msra.mxu0 %v613
  %645 = vmatpush.bf16.msra.mxu0 %v612
  %646 = vmatpush.bf16.msra.mxu0 %v611
  %647 = vmatpush.bf16.msra.mxu0 %v610
  %648 = vmatpush.bf16.msra.mxu0 %v609
  %649 = vmatmul.bf16.gmra.mxu0 %v477
  %v650 = vpop.f32.mrf.mxu0
  %v651 = vadd.f32 %v543, %v650
  %v652 = vpop.f32.mrf.mxu0
  %v653 = vadd.f32 %v543, %v652
  %654 = vmatmul.bf16.gmra.mxu0 %v479
  %v655 = vpop.f32.mrf.mxu0
  %v656 = vadd.f32 %v543, %v655
  %v657 = vpop.f32.mrf.mxu0
  %v658 = vadd.f32 %v543, %v657
  %659 = vmatmul.bf16.gmra.mxu0 %v481
  %v660 = vpop.f32.mrf.mxu0
  %v661 = vadd.f32 %v543, %v660
  %v662 = vpop.f32.mrf.mxu0
  %v663 = vadd.f32 %v543, %v662
  %664 = vmatmul.bf16.gmra.mxu0 %v483
  %v665 = vpop.f32.mrf.mxu0
  %v666 = vadd.f32 %v543, %v665
  %v667 = vpop.f32.mrf.mxu0
  %v668 = vadd.f32 %v543, %v667
  %669 = vmatmul.bf16.gmra.mxu0 %v485
  %v670 = vpop.f32.mrf.mxu0
  %v671 = vadd.f32 %v543, %v670
  %v672 = vpop.f32.mrf.mxu0
  %v673 = vadd.f32 %v543, %v672
  %674 = vmatmul.bf16.gmra.mxu0 %v487
  %v675 = vpop.f32.mrf.mxu0
  %v676 = vadd.f32 %v543, %v675
  %v677 = vpop.f32.mrf.mxu0
  %v678 = vadd.f32 %v543, %v677
  %679 = vmatmul.bf16.gmra.mxu0 %v489
  %v680 = vpop.f32.mrf.mxu0
  %v681 = vadd.f32 %v543, %v680
  %v682 = vpop.f32.mrf.mxu0
  %v683 = vadd.f32 %v543, %v682
  %684 = vmatmul.bf16.gmra.mxu0 %v491
  %v685 = vpop.f32.mrf.mxu0
  %v686 = vadd.f32 %v543, %v685
  %v687 = vpop.f32.mrf.mxu0
  %v688 = vadd.f32 %v543, %v687
  %689 = vmatmul.bf16.gmra.mxu0 %v493
  %v690 = vpop.f32.mrf.mxu0
  %v691 = vadd.f32 %v543, %v690
  %v692 = vpop.f32.mrf.mxu0
  %v693 = vadd.f32 %v543, %v692
  %694 = vmatmul.bf16.gmra.mxu0 %v495
  %v695 = vpop.f32.mrf.mxu0
  %v696 = vadd.f32 %v543, %v695
  %v697 = vpop.f32.mrf.mxu0
  %v698 = vadd.f32 %v543, %v697
  %699 = vmatmul.bf16.gmra.mxu0 %v497
  %v700 = vpop.f32.mrf.mxu0
  %v701 = vadd.f32 %v543, %v700
  %v702 = vpop.f32.mrf.mxu0
  %v703 = vadd.f32 %v543, %v702
  %704 = vmatmul.bf16.gmra.mxu0 %v499
  %v705 = vpop.f32.mrf.mxu0
  %v706 = vadd.f32 %v543, %v705
  %v707 = vpop.f32.mrf.mxu0
  %v708 = vadd.f32 %v543, %v707
  %709 = vmatmul.bf16.gmra.mxu0 %v501
  %v710 = vpop.f32.mrf.mxu0
  %v711 = vadd.f32 %v543, %v710
  %v712 = vpop.f32.mrf.mxu0
  %v713 = vadd.f32 %v543, %v712
  %714 = vmatmul.bf16.gmra.mxu0 %v503
  %v715 = vpop.f32.mrf.mxu0
  %v716 = vadd.f32 %v543, %v715
  %v717 = vpop.f32.mrf.mxu0
  %v718 = vadd.f32 %v543, %v717
  %719 = vmatmul.bf16.gmra.mxu0 %v505
  %v720 = vpop.f32.mrf.mxu0
  %v721 = vadd.f32 %v543, %v720
  %v722 = vpop.f32.mrf.mxu0
  %v723 = vadd.f32 %v543, %v722
  %724 = vmatmul.bf16.gmra.mxu0 %v507
  %v725 = vpop.f32.mrf.mxu0
  %v726 = vadd.f32 %v543, %v725
  %v727 = vpop.f32.mrf.mxu0
  %v728 = vadd.f32 %v543, %v727
  %729 = vdwg.mxu0
  %730 = vmatpush.bf16.msra.mxu0 %v624
  %731 = vmatpush.bf16.msra.mxu0 %v623
  %732 = vmatpush.bf16.msra.mxu0 %v622
  %733 = vmatpush.bf16.msra.mxu0 %v621
  %734 = vmatpush.bf16.msra.mxu0 %v620
  %735 = vmatpush.bf16.msra.mxu0 %v619
  %736 = vmatpush.bf16.msra.mxu0 %v618
  %737 = vmatpush.bf16.msra.mxu0 %v617
  %738 = vmatmul.bf16.gmra.mxu0 %v478
  %v739 = vpop.f32.mrf.mxu0
  %v740 = vadd.f32 %v651, %v739
  %v741 = vpop.f32.mrf.mxu0
  %v742 = vadd.f32 %v653, %v741
  %743 = vmatmul.bf16.gmra.mxu0 %v480
  %v744 = vpop.f32.mrf.mxu0
  %v745 = vadd.f32 %v656, %v744
  %v746 = vpop.f32.mrf.mxu0
  %v747 = vadd.f32 %v658, %v746
  %748 = vmatmul.bf16.gmra.mxu0 %v482
  %v749 = vpop.f32.mrf.mxu0
  %v750 = vadd.f32 %v661, %v749
  %v751 = vpop.f32.mrf.mxu0
  %v752 = vadd.f32 %v663, %v751
  %753 = vmatmul.bf16.gmra.mxu0 %v484
  %v754 = vpop.f32.mrf.mxu0
  %v755 = vadd.f32 %v666, %v754
  %v756 = vpop.f32.mrf.mxu0
  %v757 = vadd.f32 %v668, %v756
  %758 = vmatmul.bf16.gmra.mxu0 %v486
  %v759 = vpop.f32.mrf.mxu0
  %v760 = vadd.f32 %v671, %v759
  %v761 = vpop.f32.mrf.mxu0
  %v762 = vadd.f32 %v673, %v761
  %763 = vmatmul.bf16.gmra.mxu0 %v488
  %v764 = vpop.f32.mrf.mxu0
  %v765 = vadd.f32 %v676, %v764
  %v766 = vpop.f32.mrf.mxu0
  %v767 = vadd.f32 %v678, %v766
  %768 = vmatmul.bf16.gmra.mxu0 %v490
  %v769 = vpop.f32.mrf.mxu0
  %v770 = vadd.f32 %v681, %v769
  %v771 = vpop.f32.mrf.mxu0
  %v772 = vadd.f32 %v683, %v771
  %773 = vmatmul.bf16.gmra.mxu0 %v492
  %v774 = vpop.f32.mrf.mxu0
  %v775 = vadd.f32 %v686, %v774
  %v776 = vpop.f32.mrf.mxu0
  %v777 = vadd.f32 %v688, %v776
  %778 = vmatmul.bf16.gmra.mxu0 %v494
  %v779 = vpop.f32.mrf.mxu0
  %v780 = vadd.f32 %v691, %v779
  %v781 = vpop.f32.mrf.mxu0
  %v782 = vadd.f32 %v693, %v781
  %783 = vmatmul.bf16.gmra.mxu0 %v496
  %v784 = vpop.f32.mrf.mxu0
  %v785 = vadd.f32 %v696, %v784
  %v786 = vpop.f32.mrf.mxu0
  %v787 = vadd.f32 %v698, %v786
  %788 = vmatmul.bf16.gmra.mxu0 %v498
  %v789 = vpop.f32.mrf.mxu0
  %v790 = vadd.f32 %v701, %v789
  %v791 = vpop.f32.mrf.mxu0
  %v792 = vadd.f32 %v703, %v791
  %793 = vmatmul.bf16.gmra.mxu0 %v500
  %v794 = vpop.f32.mrf.mxu0
  %v795 = vadd.f32 %v706, %v794
  %v796 = vpop.f32.mrf.mxu0
  %v797 = vadd.f32 %v708, %v796
  %798 = vmatmul.bf16.gmra.mxu0 %v502
  %v799 = vpop.f32.mrf.mxu0
  %v800 = vadd.f32 %v711, %v799
  %v801 = vpop.f32.mrf.mxu0
  %v802 = vadd.f32 %v713, %v801
  %803 = vmatmul.bf16.gmra.mxu0 %v504
  %v804 = vpop.f32.mrf.mxu0
  %v805 = vadd.f32 %v716, %v804
  %v806 = vpop.f32.mrf.mxu0
  %v807 = vadd.f32 %v718, %v806
  %808 = vmatmul.bf16.gmra.mxu0 %v506
  %v809 = vpop.f32.mrf.mxu0
  %v810 = vadd.f32 %v721, %v809
  %v811 = vpop.f32.mrf.mxu0
  %v812 = vadd.f32 %v723, %v811
  %813 = vmatmul.bf16.gmra.mxu0 %v508
  %v814 = vpop.f32.mrf.mxu0
  %v815 = vadd.f32 %v726, %v814
  %v816 = vpop.f32.mrf.mxu0
  %v817 = vadd.f32 %v728, %v816
  %818 = vdwg.mxu0
  %v819 = vstv %s476
  %v820 = vsub.f32 %v740, %v819
  %v821 = vsub.f32 %v742, %v819
  %v822 = vsub.f32 %v745, %v819
  %v823 = vsub.f32 %v747, %v819
  %v824 = vsub.f32 %v750, %v819
  %v825 = vsub.f32 %v752, %v819
  %v826 = vsub.f32 %v755, %v819
  %v827 = vsub.f32 %v757, %v819
  %v828 = vsub.f32 %v760, %v819
  %v829 = vsub.f32 %v762, %v819
  %v830 = vsub.f32 %v765, %v819
  %v831 = vsub.f32 %v767, %v819
  %v832 = vsub.f32 %v770, %v819
  %v833 = vsub.f32 %v772, %v819
  %v834 = vsub.f32 %v775, %v819
  %v835 = vsub.f32 %v777, %v819
  %v836 = vsub.f32 %v780, %v819
  %v837 = vsub.f32 %v782, %v819
  %v838 = vsub.f32 %v785, %v819
  %v839 = vsub.f32 %v787, %v819
  %v840 = vsub.f32 %v790, %v819
  %v841 = vsub.f32 %v792, %v819
  %v842 = vsub.f32 %v795, %v819
  %v843 = vsub.f32 %v797, %v819
  %v844 = vsub.f32 %v800, %v819
  %v845 = vsub.f32 %v802, %v819
  %v846 = vsub.f32 %v805, %v819
  %v847 = vsub.f32 %v807, %v819
  %v848 = vsub.f32 %v810, %v819
  %v849 = vsub.f32 %v812, %v819
  %v850 = vsub.f32 %v815, %v819
  %v851 = vsub.f32 %v817, %v819
  %852 = vst [vmem:[%s6] sm:$0xff] %v820
  %853 = vst [vmem:[%s6 + $0x8] sm:$0xff] %v821
  %854 = vst [vmem:[%s6 + $0x10] sm:$0xff] %v822
  %855 = vst [vmem:[%s6 + $0x18] sm:$0xff] %v823
  %856 = vst [vmem:[%s6 + $0x20] sm:$0xff] %v824
  %857 = vst [vmem:[%s6 + $0x28] sm:$0xff] %v825
  %858 = vst [vmem:[%s6 + $0x30] sm:$0xff] %v826
  %859 = vst [vmem:[%s6 + $0x38] sm:$0xff] %v827
  %860 = vst [vmem:[%s6 + $0x40] sm:$0xff] %v828
  %861 = vst [vmem:[%s6 + $0x48] sm:$0xff] %v829
  %862 = vst [vmem:[%s6 + $0x50] sm:$0xff] %v830
  %863 = vst [vmem:[%s6 + $0x58] sm:$0xff] %v831
  %864 = vst [vmem:[%s6 + $0x60] sm:$0xff] %v832
  %865 = vst [vmem:[%s6 + $0x68] sm:$0xff] %v833
  %866 = vst [vmem:[%s6 + $0x70] sm:$0xff] %v834
  %867 = vst [vmem:[%s6 + $0x78] sm:$0xff] %v835
  %868 = vst [vmem:[%s6 + $0x80] sm:$0xff] %v836
  %869 = vst [vmem:[%s6 + $0x88] sm:$0xff] %v837
  %870 = vst [vmem:[%s6 + $0x90] sm:$0xff] %v838
  %871 = vst [vmem:[%s6 + $0x98] sm:$0xff] %v839
  %872 = vst [vmem:[%s6 + $0xa0] sm:$0xff] %v840
  %873 = vst [vmem:[%s6 + $0xa8] sm:$0xff] %v841
  %874 = vst [vmem:[%s6 + $0xb0] sm:$0xff] %v842
  %875 = vst [vmem:[%s6 + $0xb8] sm:$0xff] %v843
  %876 = vst [vmem:[%s6 + $0xc0] sm:$0xff] %v844
  %877 = vst [vmem:[%s6 + $0xc8] sm:$0xff] %v845
  %878 = vst [vmem:[%s6 + $0xd0] sm:$0xff] %v846
  %879 = vst [vmem:[%s6 + $0xd8] sm:$0xff] %v847
  %880 = vst [vmem:[%s6 + $0xe0] sm:$0xff] %v848
  %881 = vst [vmem:[%s6 + $0xe8] sm:$0xff] %v849
  %882 = vst [vmem:[%s6 + $0xf0] sm:$0xff] %v850
  %883 = vst [vmem:[%s6 + $0xf8] sm:$0xff] %v851
  // Predicated region
  $region26: #{dueling_dqn_forward.1} parent=0 // pred_check
    _
  $region27: #{dueling_dqn_forward.1} parent=0 // pred_check_branch
    %885 = sbr.rel (0) target = $region29
  $region28: #{dueling_dqn_forward.1} parent=0 // pred_region
    _
  $region29: #{dueling_dqn_forward.1} parent=0 // pred_fallthru
    _
  // Predicated region
  $region30: #{dueling_dqn_forward.1} parent=0 // pred_check
    _
  $region31: #{dueling_dqn_forward.1} parent=0 // pred_check_branch
    %887 = sbr.rel (0) target = $region33
  $region32: #{dueling_dqn_forward.1} parent=0 // pred_region
    _
  $region33: #{dueling_dqn_forward.1} parent=0 // pred_fallthru
    _

</llo_original>
